<compile_context>
chip_gen: v7x
topology: tpu7x:2x2x1
jax: 0.10.0
libtpu: 0.0.40
codegen_flags: <defaults>
</compile_context>

<pallas_src>
import jax
import jax.numpy as jnp
from jax.experimental import pallas as pl
from jax.experimental.pallas import tpu as pltpu


def bilinear_pooling_kernel(x1_ref, x2_ref, w_ref, b_ref, o_ref, acc_ref):
    k = pl.program_id(1)

    @pl.when(k == 0)
    def _init():
        acc_ref[...] = jnp.zeros_like(acc_ref)

    x1_blk = x1_ref[...]                     # (B_pad, tile_i)   f32
    x2_blk = x2_ref[...]                     # (B_pad, D2)       f32
    bp, ti = x1_blk.shape
    d2 = x2_blk.shape[-1]

    # Per-batch outer product over this D1-slice, flattened row-major
    # (i_local*D2 + j) to match torch's .view() of the bmm result.
    chunk = (x1_blk[:, :, None] * x2_blk[:, None, :]).reshape(bp, ti * d2)

    # (B_pad, tile_i*D2) @ (tile_i*D2, tile_o) on the MXU, f32 accumulate.
    acc_ref[...] += jnp.dot(chunk, w_ref[...],
                            preferred_element_type=jnp.float32)

    @pl.when(k == pl.num_programs(1) - 1)
    def _finalize():
        o_ref[...] = (acc_ref[...] + b_ref[...]).astype(o_ref.dtype)


def _choose_tiles(D1, D2, O, weight_bytes=4, max_w_block_bytes=4 * 1024 * 1024):
    """Pick (tile_i, tile_o) honoring (8,128)/full-dim rules and a VMEM budget."""
    # Output tile: largest multiple-of-128 divisor of O (<=512), else O itself.
    to = O
    if O % 128 == 0:
        for cand in (512, 384, 256, 128):
            if O % cand == 0:
                to = cand
                break
    # D1 tile: divides D1, keeps the W block's sublane dim (ti*D2) a multiple
    # of 8 (or the full K), and keeps the W block within the byte budget.
    divisors = [d for d in range(1, D1 + 1) if D1 % d == 0]
    valid = [d for d in divisors if (d * D2) % 8 == 0 or d == D1]
    fitting = [d for d in valid if d * D2 * to * weight_bytes <= max_w_block_bytes]
    ti = max(fitting) if fitting else min(valid)
    return ti, to


def bilinear_pooling(x1, x2, weight, bias):
    """x1: (B, D1), x2: (B, D2), weight: (O, D1*D2), bias: (O,) -> (B, O)."""
    B, D1 = x1.shape
    B2, D2 = x2.shape
    assert B == B2
    O, K = weight.shape
    assert K == D1 * D2

    x1 = x1.astype(jnp.float32)
    x2 = x2.astype(jnp.float32)
    weight = weight.astype(jnp.float32)
    bias = bias.astype(jnp.float32)

    ti, to = _choose_tiles(D1, D2, O)
    kt = D1 // ti                    # grid steps along the reduction (D1) axis
    ot = O // to                     # grid steps along the output axis
    tk = ti * D2                     # rows of W consumed per reduction step

    # Pad batch up to a sublane multiple of 8 (zeros contribute nothing).
    B_pad = max(8, -(-B // 8) * 8)
    if B_pad != B:
        x1 = jnp.pad(x1, ((0, B_pad - B), (0, 0)))
        x2 = jnp.pad(x2, ((0, B_pad - B), (0, 0)))

    # Layout plumbing outside the kernel (matches torch row-major flattening):
    #  - x1 regrouped so each grid step's D1-slice is one leading-axis block.
    #  - weight transposed to (K, O) so the kernel does a plain (B,K)@(K,O).
    x1_blocks = x1.reshape(B_pad, kt, ti).transpose(1, 0, 2)   # (kt, B_pad, ti)
    w_t = weight.T                                             # (K, O), row = i*D2 + j
    b2 = bias.reshape(1, O)

    cost = pl.CostEstimate(
        flops=int(2 * B_pad * O * K),
        transcendentals=0,
        bytes_accessed=int(4 * (K * O + B_pad * (D1 + D2 + O) + O)),
    )

    out_padded = pl.pallas_call(
        bilinear_pooling_kernel,
        out_shape=jax.ShapeDtypeStruct((B_pad, O), jnp.float32),
        grid_spec=pltpu.PrefetchScalarGridSpec(
            num_scalar_prefetch=0,
            grid=(ot, kt),
            in_specs=[
                # x1 slice for this reduction step: kernel sees (B_pad, ti).
                pl.BlockSpec((None, B_pad, ti), lambda o, k: (k, 0, 0)),
                # x2 stays resident (constant block index -> single DMA).
                pl.BlockSpec((B_pad, D2), lambda o, k: (0, 0)),
                # Streamed, double-buffered weight slab (tk, to).
                pl.BlockSpec((tk, to), lambda o, k: (k, o)),
                # Bias tile for this output block (resident per o).
                pl.BlockSpec((1, to), lambda o, k: (0, o)),
            ],
            # Constant over k -> held as the resident accumulator target.
            out_specs=pl.BlockSpec((B_pad, to), lambda o, k: (0, o)),
            scratch_shapes=[pltpu.VMEM((B_pad, to), jnp.float32)],
        ),
        compiler_params=pltpu.CompilerParams(
            dimension_semantics=("parallel", "arbitrary"),
            vmem_limit_bytes=32 * 1024 * 1024,
        ),
        cost_estimate=cost,
    )(x1_blocks, x2, w_t, b2)

    return out_padded[:B]


if __name__ == "__main__":
    # Small shapes consistent with the module's forward.
    B, D1, D2, O = 2, 8, 16, 32

    key = jax.random.PRNGKey(0)
    k1, k2, kw, kb = jax.random.split(key, 4)

    x1 = jax.random.normal(k1, (B, D1), dtype=jnp.float32)
    x2 = jax.random.normal(k2, (B, D2), dtype=jnp.float32)
    # Deterministic synthetic Linear parameters (shape from nn.Linear(D1*D2, O)).
    weight = jax.random.normal(kw, (O, D1 * D2), dtype=jnp.float32) * 0.05
    bias = jax.random.normal(kb, (O,), dtype=jnp.float32) * 0.05

    out = bilinear_pooling(x1, x2, weight, bias)
    out = jax.block_until_ready(out)

    # Pure-JAX reference check (same math as the PyTorch forward).
    outer = jnp.einsum("bi,bj->bij", x1, x2).reshape(B, D1 * D2)
    ref = outer @ weight.T + bias
    assert out.shape == (B, O)
    assert jnp.allclose(out, ref, atol=1e-5, rtol=1e-5)

    print("KERNEL_OK")
</pallas_src>

<mosaic_0001>
module attributes {stable_mosaic.version = 11 : i64} {
  func.func @bilinear_pooling_kernel(%arg0: i32, %arg1: i32, %arg2: memref<1x8x8xf32, #tpu.memory_space<vmem>>, %arg3: memref<8x16xf32, #tpu.memory_space<vmem>>, %arg4: memref<128x32xf32, #tpu.memory_space<vmem>>, %arg5: memref<1x32xf32, #tpu.memory_space<vmem>>, %arg6: memref<8x32xf32, #tpu.memory_space<vmem>>, %arg7: memref<8x32xf32, #tpu.memory_space<vmem>>) attributes {dimension_semantics = [#tpu.dimension_semantics<parallel>, #tpu.dimension_semantics<arbitrary>], iteration_bounds = array<i64: 1, 1>, scalar_prefetch = 0 : i64, scratch_operands = 1 : i64, tpu.core_type = #tpu.core_type<tc>, window_params = [{transform_indices = @transform_0, window_bounds = array<i64: 1, 8, 8>}, {pipeline_mode = #tpu.pipeline_mode<synchronous>, transform_indices = @transform_1, window_bounds = array<i64: 8, 16>}, {transform_indices = @transform_2, window_bounds = array<i64: 128, 32>}, {transform_indices = @transform_3, window_bounds = array<i64: 1, 32>}, {transform_indices = @transform_4, window_bounds = array<i64: 8, 32>}]} {
    %c0_i32 = arith.constant 0 : i32
    %0 = arith.cmpi eq, %arg1, %c0_i32 : i32
    %1 = arith.extui %0 : i1 to i32
    %c0_i32_0 = arith.constant 0 : i32
    %2 = arith.cmpi ne, %1, %c0_i32_0 : i32
    scf.if %2 {
      %cst_13 = arith.constant 0.000000e+00 : f32
      %20 = vector.broadcast %cst_13 : f32 to vector<8x32xf32>
      %c0_14 = arith.constant 0 : index
      %c0_15 = arith.constant 0 : index
      %21 = vector.load %arg7[%c0_14, %c0_15] : memref<8x32xf32, #tpu.memory_space<vmem>>, vector<8x32xf32>
      tpu.vector_store %arg7[%c0_14, %c0_15], %20 {strides = array<i32>} : memref<8x32xf32, #tpu.memory_space<vmem>>, vector<8x32xf32>,
    } else {
    }
    %c0 = arith.constant 0 : index
    %c0_1 = arith.constant 0 : index
    %c0_2 = arith.constant 0 : index
    %3 = vector.load %arg2[%c0, %c0_1, %c0_2] : memref<1x8x8xf32, #tpu.memory_space<vmem>>, vector<1x8x8xf32>
    %4 = vector.shape_cast %3 : vector<1x8x8xf32> to vector<8x8xf32>
    %c0_3 = arith.constant 0 : index
    %c0_4 = arith.constant 0 : index
    %5 = vector.load %arg3[%c0_3, %c0_4] : memref<8x16xf32, #tpu.memory_space<vmem>>, vector<8x16xf32>
    %6 = vector.shape_cast %4 : vector<8x8xf32> to vector<8x8x1xf32>
    %7 = vector.shape_cast %5 : vector<8x16xf32> to vector<8x1x16xf32>
    %8 = vector.broadcast %6 : vector<8x8x1xf32> to vector<8x8x16xf32>
    %9 = vector.broadcast %7 : vector<8x1x16xf32> to vector<8x8x16xf32>
    %10 = arith.mulf %8, %9 : vector<8x8x16xf32>
    %11 = vector.shape_cast %10 : vector<8x8x16xf32> to vector<8x128xf32>
    %c0_5 = arith.constant 0 : index
    %c0_6 = arith.constant 0 : index
    %12 = vector.load %arg7[%c0_5, %c0_6] : memref<8x32xf32, #tpu.memory_space<vmem>>, vector<8x32xf32>
    %c0_7 = arith.constant 0 : index
    %c0_8 = arith.constant 0 : index
    %13 = vector.load %arg4[%c0_7, %c0_8] : memref<128x32xf32, #tpu.memory_space<vmem>>, vector<128x32xf32>
    %cst = arith.constant dense<0.000000e+00> : vector<8x32xf32>
    %14 = tpu.matmul %11, %13, %cst {dimension_numbers = #tpu.dot_dimension_numbers<[1], [0], [0], [1], [0, 0, 1, 1], [], []>} : vector<8x128xf32>, vector<128x32xf32>, vector<8x32xf32> -> vector<8x32xf32>
    %15 = arith.addf %12, %14 : vector<8x32xf32>
    %c0_9 = arith.constant 0 : index
    %c0_10 = arith.constant 0 : index
    %16 = vector.load %arg7[%c0_9, %c0_10] : memref<8x32xf32, #tpu.memory_space<vmem>>, vector<8x32xf32>
    tpu.vector_store %arg7[%c0_9, %c0_10], %15 {strides = array<i32>} : memref<8x32xf32, #tpu.memory_space<vmem>>, vector<8x32xf32>,
    %c0_i32_11 = arith.constant 0 : i32
    %17 = arith.cmpi eq, %arg1, %c0_i32_11 : i32
    %18 = arith.extui %17 : i1 to i32
    %c0_i32_12 = arith.constant 0 : i32
    %19 = arith.cmpi ne, %18, %c0_i32_12 : i32
    scf.if %19 {
      %c0_13 = arith.constant 0 : index
      %c0_14 = arith.constant 0 : index
      %20 = vector.load %arg7[%c0_13, %c0_14] : memref<8x32xf32, #tpu.memory_space<vmem>>, vector<8x32xf32>
      %c0_15 = arith.constant 0 : index
      %c0_16 = arith.constant 0 : index
      %21 = vector.load %arg5[%c0_15, %c0_16] : memref<1x32xf32, #tpu.memory_space<vmem>>, vector<1x32xf32>
      %22 = vector.broadcast %21 : vector<1x32xf32> to vector<8x32xf32>
      %23 = arith.addf %20, %22 : vector<8x32xf32>
      %c0_17 = arith.constant 0 : index
      %c0_18 = arith.constant 0 : index
      %24 = vector.load %arg6[%c0_17, %c0_18] : memref<8x32xf32, #tpu.memory_space<vmem>>, vector<8x32xf32>
      tpu.vector_store %arg6[%c0_17, %c0_18], %23 {strides = array<i32>} : memref<8x32xf32, #tpu.memory_space<vmem>>, vector<8x32xf32>,
    } else {
    }
    return
  }
  func.func @transform_0(%arg0: i32, %arg1: i32) -> (i32, i32, i32) {
    %c0_i32 = arith.constant 0 : i32
    %c0_i32_0 = arith.constant 0 : i32
    %c0_i32_1 = arith.constant 0 : i32
    return %arg1, %c0_i32, %c0_i32_0 : i32, i32, i32
  }
  func.func @transform_1(%arg0: i32, %arg1: i32) -> (i32, i32) {
    %c0_i32 = arith.constant 0 : i32
    %c0_i32_0 = arith.constant 0 : i32
    %c0_i32_1 = arith.constant 0 : i32
    return %c0_i32, %c0_i32_0 : i32, i32
  }
  func.func @transform_2(%arg0: i32, %arg1: i32) -> (i32, i32) {
    %c0_i32 = arith.constant 0 : i32
    return %arg1, %arg0 : i32, i32
  }
  func.func @transform_3(%arg0: i32, %arg1: i32) -> (i32, i32) {
    %c0_i32 = arith.constant 0 : i32
    %c0_i32_0 = arith.constant 0 : i32
    return %c0_i32, %arg0 : i32, i32
  }
  func.func @transform_4(%arg0: i32, %arg1: i32) -> (i32, i32) {
    %c0_i32 = arith.constant 0 : i32
    %c0_i32_0 = arith.constant 0 : i32
    return %c0_i32, %arg0 : i32, i32
  }
}

</mosaic_0001>

<llo_original>
// kernel: tpu_custom_call.1
$region0: #{tpu_custom_call.1}
  #allocation0 [shape = 'u32[]', space=smem, size = 0x4, offset = 0x4, fixed_abs, tag = 'smem constant byte address 0x4 - core index']
  #allocation1 [shape = 'u32[144,128]{1,0:T(1,128)}', space=vmem, size = 0x12000, scoped, tag = 'internal scratch']
  #allocation2 [shape = 'f32[8,32]{1,0:T(8,128)}', space=vmem, size = 0x1000, scoped, tag = 'scratch operand']
  %s0 = inlined_call_operand.vmem [shape: f32[1,8,8], index: 0, kind: input, shape index: {}]
  %s1 = inlined_call_operand.vmem [shape: f32[8,16], index: 1, kind: input, shape index: {}]
  %s2 = inlined_call_operand.vmem [shape: f32[128,32], index: 2, kind: input, shape index: {}]
  %s3 = inlined_call_operand.vmem [shape: f32[1,32], index: 3, kind: input, shape index: {}]
  %s4 = inlined_call_operand.hbm [shape: f32[8,32], index: 4, kind: output, shape index: {}]
  %s5 = sld [smem:[#allocation0]]
  $region34: #{tpu_custom_call.1} parent=0
    _
  %s7 = ssub.s32 1, %s5
  %s8 = scalar_select 0, %s7, %s5
  $region1: #{tpu_custom_call.1} parent=0
    #allocation3 [shape = 'u8[4096]{0}', space=vmem, size = 0x1000, scoped, tag = 'output window, operand 0, single buffered']
    #allocation4 [shape = 's32[1]{0}', space=sflag, size = 0x4, scoped, tag = 'scoped memory for tpu_custom_call.1']
    %9 = vsyncpa [#allocation4], 0
    // Predicated region
    $region2: #{tpu_custom_call.1} parent=1 // pred_check
      _
    $region3: #{tpu_custom_call.1} parent=1 // pred_check_branch
      %11 = sbr.rel (0) target = $region5
    $region4: #{tpu_custom_call.1} parent=1 // pred_region
      _
    $region5: #{tpu_custom_call.1} parent=1 // pred_fallthru
      _
    // Predicated region
    $region6: #{tpu_custom_call.1} parent=1 // pred_check
      _
    $region7: #{tpu_custom_call.1} parent=1 // pred_check_branch
      %13 = sbr.rel (0) target = $region9
    $region8: #{tpu_custom_call.1} parent=1 // pred_region
      _
    $region9: #{tpu_custom_call.1} parent=1 // pred_fallthru
      _
    // Predicated region
    $region10: #{tpu_custom_call.1} parent=1 // pred_check
      _
    $region11: #{tpu_custom_call.1} parent=1 // pred_check_branch
      %15 = sbr.rel (0) target = $region13
    $region12: #{tpu_custom_call.1} parent=1 // pred_region
      _
    $region13: #{tpu_custom_call.1} parent=1 // pred_fallthru
      _
    // Predicated region
    $region14: #{tpu_custom_call.1} parent=1 // pred_check
      _
    $region15: #{tpu_custom_call.1} parent=1 // pred_check_branch
      %17 = sbr.rel (0) target = $region17
    $region16: #{tpu_custom_call.1} parent=1 // pred_region
      _
    $region17: #{tpu_custom_call.1} parent=1 // pred_fallthru
      _
    %p18 = scmp.eq.s32.totalorder 0, 0
    // Predicated region
    $region18: #{tpu_custom_call.1} parent=1 // pred_check
      %p19 = pneg %p18
    $region19: #{tpu_custom_call.1} parent=1 // pred_check_branch
      %21 = sbr.rel (%p19) target = $region21
    $region20: #{tpu_custom_call.1} parent=1 // pred_region
      %vm22 = vcmask 261120
      %23 = vst.msk [vmem:[#allocation2] sm:$0xff] %vm22, 0.0
    $region21: #{tpu_custom_call.1} parent=1 // pred_fallthru
      _
    %v24 = vld [vmem:[%s0] sm:$0xff]
    %v25 = vld [vmem:[%s1] sm:$0xff]
    %v26 = vlaneseq
    %v27 = vshrl.u32 %v26, 7
    %v28 = vsub.s32 0, %v27
    %v29 = vrot.slane %v24, %v28
    %31 = vbcast.lane.b32.xlu0 %v29, 256
    %v32 = vpop.permute.xlu0 %31
    %v33 = vlaneseq
    %v34 = vshrl.u32 %v33, 7
    %v35 = vsub.s32 1, %v34
    %v36 = vrot.slane %v24, %v35
    %38 = vbcast.lane.b32.xlu0 %v36, 256
    %v39 = vpop.permute.xlu0 %38
    %v40 = vlaneseq
    %v41 = vshrl.u32 %v40, 7
    %v42 = vsub.s32 2, %v41
    %v43 = vrot.slane %v24, %v42
    %45 = vbcast.lane.b32.xlu0 %v43, 256
    %v46 = vpop.permute.xlu0 %45
    %v47 = vlaneseq
    %v48 = vshrl.u32 %v47, 7
    %v49 = vsub.s32 3, %v48
    %v50 = vrot.slane %v24, %v49
    %52 = vbcast.lane.b32.xlu0 %v50, 256
    %v53 = vpop.permute.xlu0 %52
    %v54 = vlaneseq
    %v55 = vshrl.u32 %v54, 7
    %v56 = vsub.s32 4, %v55
    %v57 = vrot.slane %v24, %v56
    %59 = vbcast.lane.b32.xlu0 %v57, 256
    %v60 = vpop.permute.xlu0 %59
    %v61 = vlaneseq
    %v62 = vshrl.u32 %v61, 7
    %v63 = vsub.s32 5, %v62
    %v64 = vrot.slane %v24, %v63
    %66 = vbcast.lane.b32.xlu0 %v64, 256
    %v67 = vpop.permute.xlu0 %66
    %v68 = vlaneseq
    %v69 = vshrl.u32 %v68, 7
    %v70 = vsub.s32 6, %v69
    %v71 = vrot.slane %v24, %v70
    %73 = vbcast.lane.b32.xlu0 %v71, 256
    %v74 = vpop.permute.xlu0 %73
    %v75 = vlaneseq
    %v76 = vshrl.u32 %v75, 7
    %v77 = vsub.s32 7, %v76
    %v78 = vrot.slane %v24, %v77
    %80 = vbcast.lane.b32.xlu0 %v78, 256
    %v81 = vpop.permute.xlu0 %80
    %v83 = vcombine.high %v25, %v25
    %v85 = vunpack.c.l.s4 1966171168
    %v86 = vunpack.c.0.s8 %v85
    %v87 = vlaneseq
    %v88 = vshrl.u32 %v87, 7
    %v89 = vsub.s32 %v86, %v88
    %v90 = vrot.slane %v25, %v89
    %v92 = vunpack.c.l.s4 1966171168
    %v93 = vunpack.c.0.s8 %v92
    %v94 = vlaneseq
    %v95 = vshrl.u32 %v94, 7
    %v96 = vsub.s32 %v93, %v95
    %v97 = vrot.slane %v83, %v96
    %v98 = vcombine.high %v90, %v90
    %v99 = vcombine.high %v97, %v97
    %v101 = vunpack.c.l.s4 1966171168
    %v102 = vunpack.c.0.s8 %v101
    %v103 = vlaneseq
    %v104 = vshrl.u32 %v103, 7
    %v105 = vsub.s32 %v102, %v104
    %v106 = vrot.slane %v90, %v105
    %v108 = vunpack.c.l.s4 1966171168
    %v109 = vunpack.c.0.s8 %v108
    %v110 = vlaneseq
    %v111 = vshrl.u32 %v110, 7
    %v112 = vsub.s32 %v109, %v111
    %v113 = vrot.slane %v97, %v112
    %v115 = vunpack.c.l.s4 1966171168
    %v116 = vunpack.c.0.s8 %v115
    %v117 = vlaneseq
    %v118 = vshrl.u32 %v117, 7
    %v119 = vsub.s32 %v116, %v118
    %v120 = vrot.slane %v98, %v119
    %v122 = vunpack.c.l.s4 1966171168
    %v123 = vunpack.c.0.s8 %v122
    %v124 = vlaneseq
    %v125 = vshrl.u32 %v124, 7
    %v126 = vsub.s32 %v123, %v125
    %v127 = vrot.slane %v99, %v126
    %v128 = vcombine.high %v106, %v106
    %v129 = vcombine.high %v113, %v113
    %v130 = vcombine.high %v120, %v120
    %v131 = vcombine.high %v127, %v127
    %v132 = vlaneseq
    %v133 = vshrl.u32 %v132, 7
    %v134 = vsub.s32 0, %v133
    %v135 = vrot.slane %v106, %v134
    %v136 = vlaneseq
    %v137 = vshrl.u32 %v136, 7
    %v138 = vsub.s32 0, %v137
    %v139 = vrot.slane %v120, %v138
    %v140 = vlaneseq
    %v141 = vshrl.u32 %v140, 7
    %v142 = vsub.s32 0, %v141
    %v143 = vrot.slane %v128, %v142
    %v144 = vlaneseq
    %v145 = vshrl.u32 %v144, 7
    %v146 = vsub.s32 0, %v145
    %v147 = vrot.slane %v130, %v146
    %v148 = vlaneseq
    %v149 = vshrl.u32 %v148, 7
    %v150 = vsub.s32 0, %v149
    %v151 = vrot.slane %v113, %v150
    %v152 = vlaneseq
    %v153 = vshrl.u32 %v152, 7
    %v154 = vsub.s32 0, %v153
    %v155 = vrot.slane %v127, %v154
    %v156 = vlaneseq
    %v157 = vshrl.u32 %v156, 7
    %v158 = vsub.s32 0, %v157
    %v159 = vrot.slane %v129, %v158
    %v160 = vlaneseq
    %v161 = vshrl.u32 %v160, 7
    %v162 = vsub.s32 0, %v161
    %v163 = vrot.slane %v131, %v162
    %v172 = vmul.f32 %v32, %v135
    %v173 = vmul.f32 %v39, %v139
    %v174 = vmul.f32 %v46, %v143
    %v175 = vmul.f32 %v53, %v147
    %v176 = vmul.f32 %v60, %v151
    %v177 = vmul.f32 %v67, %v155
    %v178 = vmul.f32 %v74, %v159
    %v179 = vmul.f32 %v81, %v163
    %v180 = vcombine.low %v172, %v174
    %v181 = vcombine.high %v172, %v174
    %v183 = vunpack.c.l.s4 1983009808
    %v184 = vunpack.c.0.s8 %v183
    %v185 = vlaneseq
    %v186 = vshrl.u32 %v185, 7
    %v187 = vsub.s32 %v184, %v186
    %v188 = vrot.slane %v180, %v187
    %v190 = vunpack.c.l.s4 1983009808
    %v191 = vunpack.c.0.s8 %v190
    %v192 = vlaneseq
    %v193 = vshrl.u32 %v192, 7
    %v194 = vsub.s32 %v191, %v193
    %v195 = vrot.slane %v181, %v194
    %v196 = vcombine.low %v173, %v175
    %v197 = vcombine.high %v173, %v175
    %v199 = vunpack.c.l.s4 1983009808
    %v200 = vunpack.c.0.s8 %v199
    %v201 = vlaneseq
    %v202 = vshrl.u32 %v201, 7
    %v203 = vsub.s32 %v200, %v202
    %v204 = vrot.slane %v196, %v203
    %v206 = vunpack.c.l.s4 1983009808
    %v207 = vunpack.c.0.s8 %v206
    %v208 = vlaneseq
    %v209 = vshrl.u32 %v208, 7
    %v210 = vsub.s32 %v207, %v209
    %v211 = vrot.slane %v197, %v210
    %v212 = vcombine.low %v176, %v178
    %v213 = vcombine.high %v176, %v178
    %v215 = vunpack.c.l.s4 1983009808
    %v216 = vunpack.c.0.s8 %v215
    %v217 = vlaneseq
    %v218 = vshrl.u32 %v217, 7
    %v219 = vsub.s32 %v216, %v218
    %v220 = vrot.slane %v212, %v219
    %v222 = vunpack.c.l.s4 1983009808
    %v223 = vunpack.c.0.s8 %v222
    %v224 = vlaneseq
    %v225 = vshrl.u32 %v224, 7
    %v226 = vsub.s32 %v223, %v225
    %v227 = vrot.slane %v213, %v226
    %v228 = vcombine.low %v177, %v179
    %v229 = vcombine.high %v177, %v179
    %v231 = vunpack.c.l.s4 1983009808
    %v232 = vunpack.c.0.s8 %v231
    %v233 = vlaneseq
    %v234 = vshrl.u32 %v233, 7
    %v235 = vsub.s32 %v232, %v234
    %v236 = vrot.slane %v228, %v235
    %v238 = vunpack.c.l.s4 1983009808
    %v239 = vunpack.c.0.s8 %v238
    %v240 = vlaneseq
    %v241 = vshrl.u32 %v240, 7
    %v242 = vsub.s32 %v239, %v241
    %v243 = vrot.slane %v229, %v242
    %v244 = vcombine.low %v188, %v204
    %v245 = vcombine.high %v188, %v204
    %v247 = vunpack.c.l.s4 1934713408
    %v248 = vunpack.c.0.s8 %v247
    %v249 = vlaneseq
    %v250 = vshrl.u32 %v249, 7
    %v251 = vsub.s32 %v248, %v250
    %v252 = vrot.slane %v244, %v251
    %v254 = vunpack.c.l.s4 1934713408
    %v255 = vunpack.c.0.s8 %v254
    %v256 = vlaneseq
    %v257 = vshrl.u32 %v256, 7
    %v258 = vsub.s32 %v255, %v257
    %v259 = vrot.slane %v245, %v258
    %v260 = vcombine.low %v195, %v211
    %v261 = vcombine.high %v195, %v211
    %v263 = vunpack.c.l.s4 1934713408
    %v264 = vunpack.c.0.s8 %v263
    %v265 = vlaneseq
    %v266 = vshrl.u32 %v265, 7
    %v267 = vsub.s32 %v264, %v266
    %v268 = vrot.slane %v260, %v267
    %v270 = vunpack.c.l.s4 1934713408
    %v271 = vunpack.c.0.s8 %v270
    %v272 = vlaneseq
    %v273 = vshrl.u32 %v272, 7
    %v274 = vsub.s32 %v271, %v273
    %v275 = vrot.slane %v261, %v274
    %v276 = vcombine.low %v220, %v236
    %v277 = vcombine.high %v220, %v236
    %v279 = vunpack.c.l.s4 1934713408
    %v280 = vunpack.c.0.s8 %v279
    %v281 = vlaneseq
    %v282 = vshrl.u32 %v281, 7
    %v283 = vsub.s32 %v280, %v282
    %v284 = vrot.slane %v276, %v283
    %v286 = vunpack.c.l.s4 1934713408
    %v287 = vunpack.c.0.s8 %v286
    %v288 = vlaneseq
    %v289 = vshrl.u32 %v288, 7
    %v290 = vsub.s32 %v287, %v289
    %v291 = vrot.slane %v277, %v290
    %v292 = vcombine.low %v227, %v243
    %v293 = vcombine.high %v227, %v243
    %v295 = vunpack.c.l.s4 1934713408
    %v296 = vunpack.c.0.s8 %v295
    %v297 = vlaneseq
    %v298 = vshrl.u32 %v297, 7
    %v299 = vsub.s32 %v296, %v298
    %v300 = vrot.slane %v292, %v299
    %v302 = vunpack.c.l.s4 1934713408
    %v303 = vunpack.c.0.s8 %v302
    %v304 = vlaneseq
    %v305 = vshrl.u32 %v304, 7
    %v306 = vsub.s32 %v303, %v305
    %v307 = vrot.slane %v293, %v306
    %v308 = vcombine.low %v252, %v284
    %v309 = vcombine.high %v252, %v284
    %v310 = vcombine.low %v259, %v291
    %v311 = vcombine.high %v259, %v291
    %v312 = vcombine.low %v268, %v300
    %v313 = vcombine.high %v268, %v300
    %v314 = vcombine.low %v275, %v307
    %v315 = vcombine.high %v275, %v307
    %317 = vrot.lane.b32.xlu0 %v309, 16
    %v318 = vpop.permute.xlu0 %317
    %321 = vrot.lane.b32.xlu0 %v310, 32
    %v322 = vpop.permute.xlu0 %321
    %325 = vrot.lane.b32.xlu0 %v311, 48
    %v326 = vpop.permute.xlu0 %325
    %329 = vrot.lane.b32.xlu0 %v312, 64
    %v330 = vpop.permute.xlu0 %329
    %333 = vrot.lane.b32.xlu0 %v313, 80
    %v334 = vpop.permute.xlu0 %333
    %337 = vrot.lane.b32.xlu0 %v314, 96
    %v338 = vpop.permute.xlu0 %337
    %341 = vrot.lane.b32.xlu0 %v315, 112
    %v342 = vpop.permute.xlu0 %341
    %vm344 = vcmask 130048
    %v345 = vsel %vm344, %v308, %v318
    %vm346 = vcmask 261120
    %v347 = vsel %vm346, %v345, %v322
    %vm348 = vcmask 392192
    %v349 = vsel %vm348, %v347, %v326
    %vm350 = vcmask 523264
    %v351 = vsel %vm350, %v349, %v330
    %vm352 = vcmask 654336
    %v353 = vsel %vm352, %v351, %v334
    %vm354 = vcmask 785408
    %v355 = vsel %vm354, %v353, %v338
    %vm356 = vcmask 916480
    %v357 = vsel %vm356, %v355, %v342
    %v358 = vld [vmem:[#allocation2] sm:$0xff]
    %v359 = vld [vmem:[%s2] sm:$0xff]
    %v360 = vld [vmem:[%s2 + $0x8] sm:$0xff]
    %v361 = vld [vmem:[%s2 + $0x10] sm:$0xff]
    %v362 = vld [vmem:[%s2 + $0x18] sm:$0xff]
    %v363 = vld [vmem:[%s2 + $0x20] sm:$0xff]
    %v364 = vld [vmem:[%s2 + $0x28] sm:$0xff]
    %v365 = vld [vmem:[%s2 + $0x30] sm:$0xff]
    %v366 = vld [vmem:[%s2 + $0x38] sm:$0xff]
    %v367 = vld [vmem:[%s2 + $0x40] sm:$0xff]
    %v368 = vld [vmem:[%s2 + $0x48] sm:$0xff]
    %v369 = vld [vmem:[%s2 + $0x50] sm:$0xff]
    %v370 = vld [vmem:[%s2 + $0x58] sm:$0xff]
    %v371 = vld [vmem:[%s2 + $0x60] sm:$0xff]
    %v372 = vld [vmem:[%s2 + $0x68] sm:$0xff]
    %v373 = vld [vmem:[%s2 + $0x70] sm:$0xff]
    %v374 = vld [vmem:[%s2 + $0x78] sm:$0xff]
    %375 = vmatprep.subr.mxu0 0.0
    %376 = vmatpush1.msra.mxu0 %v359
    %377 = vmatprep.subr.mxu0 0.0
    %378 = vmatpush1.msra.mxu0 %v360
    %379 = vmatprep.subr.mxu0 0.0
    %380 = vmatpush1.msra.mxu0 %v361
    %381 = vmatprep.subr.mxu0 0.0
    %382 = vmatpush1.msra.mxu0 %v362
    %383 = vmatprep.subr.mxu0 0.0
    %384 = vmatpush1.msra.mxu0 %v363
    %385 = vmatprep.subr.mxu0 0.0
    %386 = vmatpush1.msra.mxu0 %v364
    %387 = vmatprep.subr.mxu0 0.0
    %388 = vmatpush1.msra.mxu0 %v365
    %389 = vmatprep.subr.mxu0 0.0
    %390 = vmatpush1.msra.mxu0 %v366
    %391 = vmatprep.subr.mxu0 0.0
    %392 = vmatpush1.msra.mxu0 %v367
    %393 = vmatprep.subr.mxu0 0.0
    %394 = vmatpush1.msra.mxu0 %v368
    %395 = vmatprep.subr.mxu0 0.0
    %396 = vmatpush1.msra.mxu0 %v369
    %397 = vmatprep.subr.mxu0 0.0
    %398 = vmatpush1.msra.mxu0 %v370
    %399 = vmatprep.subr.mxu0 0.0
    %400 = vmatpush1.msra.mxu0 %v371
    %401 = vmatprep.subr.mxu0 0.0
    %402 = vmatpush1.msra.mxu0 %v372
    %403 = vmatprep.subr.mxu0 0.0
    %404 = vmatpush1.msra.mxu0 %v373
    %405 = vmatprep.subr.mxu0 0.0
    %406 = vmatpush1.msra.mxu0 %v374
    %407 = vmatprep.subr.mxu0 0.0
    %408 = vmatpush1.msra.mxu0 0.0
    %409 = vmatprep.subr.mxu0 0.0
    %410 = vmatpush1.msra.mxu0 0.0
    %411 = vmatprep.subr.mxu0 0.0
    %412 = vmatpush1.msra.mxu0 0.0
    %413 = vmatprep.subr.mxu0 0.0
    %414 = vmatpush1.msra.mxu0 0.0
    %415 = vmatprep.subr.mxu0 0.0
    %416 = vmatpush1.msra.mxu0 0.0
    %417 = vmatprep.subr.mxu0 0.0
    %418 = vmatpush1.msra.mxu0 0.0
    %419 = vmatprep.subr.mxu0 0.0
    %420 = vmatpush1.msra.mxu0 0.0
    %421 = vmatprep.subr.mxu0 0.0
    %422 = vmatpush1.msra.mxu0 0.0
    %423 = vmatprep.subr.mxu0 0.0
    %424 = vmatpush1.msra.mxu0 0.0
    %425 = vmatprep.subr.mxu0 0.0
    %426 = vmatpush1.msra.mxu0 0.0
    %427 = vmatprep.subr.mxu0 0.0
    %428 = vmatpush1.msra.mxu0 0.0
    %429 = vmatprep.subr.mxu0 0.0
    %430 = vmatpush1.msra.mxu0 0.0
    %431 = vmatprep.subr.mxu0 0.0
    %432 = vmatpush1.msra.mxu0 0.0
    %433 = vmatprep.subr.mxu0 0.0
    %434 = vmatpush1.msra.mxu0 0.0
    %435 = vmatprep.subr.mxu0 0.0
    %436 = vmatpush1.msra.mxu0 0.0
    %437 = vmatprep.subr.mxu0 0.0
    %438 = vmatpush1.msra.mxu0 0.0
    %439 = vmatprep.mubr.f32.mxu0 0.0
    %440 = vmatmul.mubr.f32.gmra.mrb[0].mxu0 %v357
    %v441 = vpop.f32.mrb[0].mxu0
    %v442 = vadd.f32 0.0, %v441
    %v443 = vpop.f32.mrb[0].mxu0
    %444 = vdwg.mxu0
    %v445 = vadd.f32 %v358, %v442
    %446 = vst.msk [vmem:[#allocation2] sm:$0xff] %vm346, %v445
    // Predicated region
    $region22: #{tpu_custom_call.1} parent=1 // pred_check
      %p447 = pneg %p18
    $region23: #{tpu_custom_call.1} parent=1 // pred_check_branch
      %449 = sbr.rel (%p447) target = $region25
    $region24: #{tpu_custom_call.1} parent=1 // pred_region
      %v450 = vld [vmem:[#allocation2] sm:$0xff]
      %v451 = vld [vmem:[%s3] sm:$0x1]
      %v453 = vlaneseq
      %v454 = vshrl.u32 %v453, 7
      %v455 = vsub.s32 0, %v454
      %v456 = vrot.slane %v451, %v455
      %v458 = vadd.f32 %v450, %v456
      %459 = vst.msk [vmem:[#allocation3] sm:$0xff] %vm346, %v458
    $region25: #{tpu_custom_call.1} parent=1 // pred_fallthru
      _
    // Predicated region
    $region26: #{tpu_custom_call.1} parent=1 // pred_check
      _
    $region27: #{tpu_custom_call.1} parent=1 // pred_check_branch
      %461 = sbr.rel (0) target = $region29
    $region28: #{tpu_custom_call.1} parent=1 // pred_region
      %s463 = ssub.s32 128, 128
      %464 = vsyncadd [#allocation4], %s463
      %s466 = sshll.u32 [#allocation3], 4
      %s467 = int_to_ptr.vmem [resolvable:$true] %s466
      %469 = dma.vmem_to_hbm [thread:$0]  %s467, 128, %s4, [#allocation4]
    $region29: #{tpu_custom_call.1} parent=1 // pred_fallthru
      _
    // Predicated region
    $region30: #{tpu_custom_call.1} parent=1 // pred_check
      _
    $region31: #{tpu_custom_call.1} parent=1 // pred_check_branch
      %471 = sbr.rel (0) target = $region33
    $region32: #{tpu_custom_call.1} parent=1 // pred_region
      %472 = dma.done [#allocation4], 128
    $region33: #{tpu_custom_call.1} parent=1 // pred_fallthru
      _
    %473 = vsyncpa [#allocation4], 1

</llo_original>
